<compile_context>
chip_gen: v7x
topology: tpu7x:2x2x1
jax: 0.10.0
libtpu: 0.0.40
codegen_flags: <defaults>
</compile_context>

<pallas_src>
import functools
import math

import jax
import jax.numpy as jnp
import numpy as np
from jax import lax
from jax.experimental import pallas as pl
from jax.experimental.pallas import tpu as pltpu


def _tile_topk(x, axis, k):
    """Top-k values of `x` along `axis` (descending, duplicates kept).

    Returns a tensor with size k along `axis`. Uses a min-index retire (no
    argmax / sort, which may not lower in Mosaic) so tied values keep their
    multiplicity, matching torch.sort value semantics.
    """
    outs = []
    w = x
    idx = None
    for t in range(k):
        m = jnp.max(w, axis=axis, keepdims=True)
        outs.append(m)
        if t + 1 < k:
            if idx is None:
                idx = lax.broadcasted_iota(jnp.int32, w.shape, axis).astype(
                    jnp.float32)
            first = jnp.min(jnp.where(w == m, idx, jnp.float32(1e9)),
                            axis=axis, keepdims=True)
            w = jnp.where(idx == first, -jnp.inf, w)
    return outs[0] if k == 1 else jnp.concatenate(outs, axis=axis)


def _hncl_kernel(imgs_ref, capsT_ref, col_out_ref, row_out_ref, *,
                 nmax, ti, tj, n_valid, padded):
    i = pl.program_id(0)          # row tile (images)   -- outer grid axis
    j = pl.program_id(1)          # col tile (captions) -- inner (fast) axis
    row0 = i * ti
    col0 = j * tj

    a = imgs_ref[...]             # (Ti, D), native dtype -> full-rate MXU path
    bt = capsT_ref[...]           # (D, Tj), pre-transposed in the wrapper
    scores = jnp.dot(a, bt, preferred_element_type=jnp.float32)    # (Ti, Tj)

    def _emit(mod):
        # Hard-negative candidates of this tile, written straight to outputs.
        s_col, s_row = mod, mod
        if padded:                # static Python bool: only traced when padded
            gr = row0 + lax.broadcasted_iota(jnp.int32, (ti, tj), 0)
            gc = col0 + lax.broadcasted_iota(jnp.int32, (ti, tj), 1)
            s_col = jnp.where(gr < n_valid, mod, -jnp.inf)   # drop padded rows
            s_row = jnp.where(gc < n_valid, mod, -jnp.inf)   # drop padded cols
        col_topk = _tile_topk(s_col, axis=0, k=nmax)         # (nmax, Tj), lane-dense
        col_out_ref[...] = col_topk.reshape(1, nmax, tj)
        row_topk = _tile_topk(s_row, axis=1, k=nmax)         # (Ti, nmax)
        row_out_ref[...] = row_topk.reshape(1, ti, nmax)

    # Only tiles whose global row/col ranges overlap contain diagonal entries;
    # gate all diagonal work there so off-diagonal tiles skip the iota/select.
    has_diag = jnp.logical_and(row0 < col0 + tj, col0 < row0 + ti)

    @pl.when(has_diag)
    def _():
        gr = row0 + lax.broadcasted_iota(jnp.int32, (ti, tj), 0)
        gc = col0 + lax.broadcasted_iota(jnp.int32, (ti, tj), 1)
        _emit(jnp.where(gr == gc, -scores, scores))   # == scores - 2*diag(diag)

    @pl.when(jnp.logical_not(has_diag))
    def _():
        _emit(scores)


def _round_up(x, m):
    return ((x + m - 1) // m) * m


def _vmem_budget_bytes():
    cap = None
    try:
        cap = getattr(pltpu.get_tpu_info(), "vmem_capacity_bytes", None)
    except Exception:
        cap = None
    if not cap:
        cap = 64 * 1024 * 1024            # conservative: v7x physical per-TC
    # ~2/3 of physical leaves headroom for Mosaic-internal scratch; 128 MiB
    # parts (v5e/v6e) land at ~85 MiB, v7x at ~42 MiB.
    return int(min(cap * 2 // 3, 100 * 1024 * 1024))


def _footprint_bytes(ti, tj, d, itemsize, nmax):
    inputs = 2 * (ti * d + d * tj) * itemsize         # double-buffered tiles
    temps = 4 * ti * tj * 4                           # scores + branch temps
    outs = 2 * (nmax * max(tj, 128) + ti * 128) * 4   # lane-padded out blocks
    return inputs + temps + outs + (2 << 20)


def _choose_tiling(n, d, itemsize, nmax, budget):
    """Returns (n_pad, tile_rows, tile_cols)."""
    if n <= 256:                                      # single tile, full dims
        n_pad = _round_up(n, 8)
        return n_pad, n_pad, n_pad
    n_pad = _round_up(n, 128)
    tj = 256 if n_pad % 256 == 0 else 128             # full-width MXU on v6e/v7x
    ti = 128
    for cand in (n_pad, 2048, 1024, 512, 256, 128):
        if n_pad % cand:
            continue
        if _footprint_bytes(cand, tj, d, itemsize, nmax) <= budget * 3 // 4:
            ti = cand
            break
    return n_pad, ti, tj


def hard_negative_contrastive_loss(imgs, caps, nmax: int = 1, margin: float = 0.2,
                                   tile_rows: int | None = None,
                                   tile_cols: int | None = None,
                                   cast_to_bf16: bool = False):
    """imgs, caps: (N, D) embeddings. Returns the scalar loss (f32)."""
    assert imgs.ndim == 2 and imgs.shape == caps.shape
    n, d = imgs.shape
    nmax = int(nmax)
    assert 1 <= nmax <= n, "nmax must be in [1, N]"

    if cast_to_bf16:
        # Halves the caps HBM stream and uses the full-rate bf16 MXU path;
        # accumulation stays f32 via preferred_element_type. Minor numerics change.
        imgs = imgs.astype(jnp.bfloat16)
        caps = caps.astype(jnp.bfloat16)
    itemsize = jnp.dtype(imgs.dtype).itemsize

    budget = _vmem_budget_bytes()
    if tile_rows is None or tile_cols is None:
        n_pad, ti, tj = _choose_tiling(n, d, itemsize, nmax, budget)
    else:
        ti, tj = int(tile_rows), int(tile_cols)
        n_pad = _round_up(n, math.lcm(ti, tj))
    assert n_pad % ti == 0 and n_pad % tj == 0
    assert ti == n_pad or ti % 8 == 0, "tile_rows must be a multiple of 8"
    assert tj == n_pad or tj % 128 == 0, "tile_cols must be a multiple of 128"
    assert nmax <= min(ti, tj)
    nbi, nbj = n_pad // ti, n_pad // tj
    pad = n_pad - n

    imgs_p = jnp.pad(imgs, ((0, pad), (0, 0))) if pad else imgs
    caps_p = jnp.pad(caps, ((0, pad), (0, 0))) if pad else caps
    caps_t = jnp.transpose(caps_p)      # one-off O(N*D); avoids in-kernel transpose

    kernel = functools.partial(_hncl_kernel, nmax=nmax, ti=ti, tj=tj,
                               n_valid=n, padded=bool(pad))
    col_part, row_part = pl.pallas_call(
        kernel,
        out_shape=(
            jax.ShapeDtypeStruct((nbi, nmax, n_pad), jnp.float32),  # col maxima
            jax.ShapeDtypeStruct((nbj, n_pad, nmax), jnp.float32),  # row maxima
        ),
        grid_spec=pltpu.PrefetchScalarGridSpec(
            num_scalar_prefetch=0,
            grid=(nbi, nbj),
            in_specs=[
                # imgs row tile: block index only changes once per nj steps.
                pl.BlockSpec((ti, d), lambda i, j: (i, 0)),
                # caps^T column tile: streamed every step (the HBM-bound stream).
                pl.BlockSpec((d, tj), lambda i, j: (0, j)),
            ],
            out_specs=[
                pl.BlockSpec((1, nmax, tj), lambda i, j: (i, 0, j)),
                pl.BlockSpec((1, ti, nmax), lambda i, j: (j, i, 0)),
            ],
        ),
        compiler_params=pltpu.CompilerParams(
            # No cross-step scratch: each grid step writes its own output blocks,
            # so both axes can be "parallel" (uses both TensorCores on v7x).
            dimension_semantics=("parallel", "parallel"),
            vmem_limit_bytes=budget,
        ),
    )(imgs_p, caps_t)

    # ---- cheap JAX epilogue: O(N*nblk) merge + O(N*D) diag + hinge sums ------
    diag = jnp.sum(imgs.astype(jnp.float32) * caps.astype(jnp.float32), axis=1)
    if nmax == 1:
        max_c = jnp.max(col_part[:, 0, :n], axis=0)             # (N,) per caption
        max_i = jnp.max(row_part[:, :n, 0], axis=0)             # (N,) per image
        neg_cap = jnp.sum(jnp.maximum(max_c + (margin - diag), 0.0))
        neg_img = jnp.sum(jnp.maximum(max_i + (margin - diag), 0.0))
    else:
        cand_c = col_part[:, :, :n].reshape(-1, n)               # (nbi*nmax, N)
        cand_i = jnp.transpose(row_part[:, :n, :], (0, 2, 1)).reshape(-1, n)
        top_c = -jnp.sort(-cand_c, axis=0)[:nmax]                # (nmax, N)
        top_i = -jnp.sort(-cand_i, axis=0)[:nmax]                # (nmax, N)
        neg_cap = jnp.sum(jnp.maximum(top_c + (margin - diag)[None, :], 0.0))
        neg_img = jnp.sum(jnp.maximum(top_i + (margin - diag)[None, :], 0.0))
    return neg_cap + neg_img


def _reference_loss(imgs, caps, nmax=1, margin=0.2):
    """Pure-JAX reference mirroring the PyTorch module."""
    scores = imgs.astype(jnp.float32) @ caps.astype(jnp.float32).T
    diag = jnp.diag(scores)
    scores = scores - 2.0 * jnp.diag(diag)
    sorted_cap = -jnp.sort(-scores, axis=0)          # descending along dim 0
    sorted_img = -jnp.sort(-scores, axis=1)          # descending along dim 1
    max_c = sorted_cap[:nmax, :]
    max_i = sorted_img[:, :nmax]
    neg_cap = jnp.sum(jnp.maximum(max_c + (margin - diag)[None, :], 0.0))
    neg_img = jnp.sum(jnp.maximum(max_i + (margin - diag)[:, None], 0.0))
    return neg_cap + neg_img


if __name__ == "__main__":
    key = jax.random.PRNGKey(0)
    keys = jax.random.split(key, 6)

    def _unit(k, shape):
        x = jax.random.normal(k, shape, dtype=jnp.float32)
        return x / jnp.linalg.norm(x, axis=1, keepdims=True)

    # 1) tiny single-tile case: N=8 (img, caption) pairs, D=32 embedding dim.
    imgs = _unit(keys[0], (8, 32))
    caps = _unit(keys[1], (8, 32))
    got = jax.block_until_ready(
        hard_negative_contrastive_loss(imgs, caps, nmax=1, margin=0.2))
    np.testing.assert_allclose(np.asarray(got),
                               np.asarray(_reference_loss(imgs, caps)),
                               rtol=1e-4, atol=1e-4)

    # 2) multi-tile 2x2 grid with lane/MXU-aligned 128 tiles; nmax=1 and nmax=2.
    imgs2 = _unit(keys[2], (256, 32))
    caps2 = _unit(keys[3], (256, 32))
    for nm in (1, 2):
        got2 = jax.block_until_ready(hard_negative_contrastive_loss(
            imgs2, caps2, nmax=nm, margin=0.2, tile_rows=128, tile_cols=128))
        ref2 = _reference_loss(imgs2, caps2, nmax=nm)
        np.testing.assert_allclose(np.asarray(got2), np.asarray(ref2),
                                   rtol=1e-4, atol=1e-4)

    # 3) awkward N (padding path): N=200 padded to 256, 2x2 grid of tiles.
    imgs3 = _unit(keys[4], (200, 32))
    caps3 = _unit(keys[5], (200, 32))
    got3 = jax.block_until_ready(hard_negative_contrastive_loss(
        imgs3, caps3, nmax=1, margin=0.2, tile_rows=128, tile_cols=128))
    np.testing.assert_allclose(np.asarray(got3),
                               np.asarray(_reference_loss(imgs3, caps3)),
                               rtol=1e-4, atol=1e-4)

    print("KERNEL_OK")
</pallas_src>

<mosaic_0001>
module attributes {stable_mosaic.version = 11 : i64} {
  func.func @_hncl_kernel(%arg0: i32, %arg1: i32, %arg2: memref<8x32xf32, #tpu.memory_space<vmem>>, %arg3: memref<32x8xf32, #tpu.memory_space<vmem>>, %arg4: memref<1x1x8xf32, #tpu.memory_space<vmem>>, %arg5: memref<1x8x1xf32, #tpu.memory_space<vmem>>) attributes {dimension_semantics = [#tpu.dimension_semantics<parallel>, #tpu.dimension_semantics<parallel>], iteration_bounds = array<i64: 1, 1>, scalar_prefetch = 0 : i64, scratch_operands = 0 : i64, tpu.core_type = #tpu.core_type<tc>, window_params = [{transform_indices = @transform_0, window_bounds = array<i64: 8, 32>}, {transform_indices = @transform_1, window_bounds = array<i64: 32, 8>}, {transform_indices = @transform_2, window_bounds = array<i64: 1, 1, 8>}, {transform_indices = @transform_3, window_bounds = array<i64: 1, 8, 1>}]} {
    %c8_i32 = arith.constant 8 : i32
    %0 = arith.muli %arg0, %c8_i32 : i32
    %c8_i32_0 = arith.constant 8 : i32
    %1 = arith.muli %arg1, %c8_i32_0 : i32
    %c0 = arith.constant 0 : index
    %c0_1 = arith.constant 0 : index
    %2 = vector.load %arg2[%c0, %c0_1] : memref<8x32xf32, #tpu.memory_space<vmem>>, vector<8x32xf32>
    %c0_2 = arith.constant 0 : index
    %c0_3 = arith.constant 0 : index
    %3 = vector.load %arg3[%c0_2, %c0_3] : memref<32x8xf32, #tpu.memory_space<vmem>>, vector<32x8xf32>
    %cst = arith.constant dense<0.000000e+00> : vector<8x8xf32>
    %4 = tpu.matmul %2, %3, %cst {dimension_numbers = #tpu.dot_dimension_numbers<[1], [0], [0], [1], [0, 0, 1, 1], [], []>} : vector<8x32xf32>, vector<32x8xf32>, vector<8x8xf32> -> vector<8x8xf32>
    %c8_i32_4 = arith.constant 8 : i32
    %5 = arith.addi %1, %c8_i32_4 : i32
    %6 = arith.cmpi slt, %0, %5 : i32
    %c8_i32_5 = arith.constant 8 : i32
    %7 = arith.addi %0, %c8_i32_5 : i32
    %8 = arith.cmpi slt, %1, %7 : i32
    %9 = arith.andi %6, %8 : i1
    %10 = arith.extui %9 : i1 to i32
    %c0_i32 = arith.constant 0 : i32
    %11 = arith.cmpi ne, %10, %c0_i32 : i32
    scf.if %11 {
      %15 = tpu.iota {dimensions = array<i32: 0>} : vector<8x8xi32>
      %16 = vector.broadcast %0 : i32 to vector<8x8xi32>
      %17 = arith.addi %16, %15 : vector<8x8xi32>
      %18 = tpu.iota {dimensions = array<i32: 1>} : vector<8x8xi32>
      %19 = vector.broadcast %1 : i32 to vector<8x8xi32>
      %20 = arith.addi %19, %18 : vector<8x8xi32>
      %21 = arith.cmpi eq, %17, %20 : vector<8x8xi32>
      %cst_7 = arith.constant 0.000000e+00 : f32
      %22 = vector.broadcast %cst_7 : f32 to vector<8x8xf32>
      %23 = arith.subf %22, %4 : vector<8x8xf32>
      %24 = arith.select %21, %23, %4 : vector<8x8xi1>, vector<8x8xf32>
      %cst_8 = arith.constant dense<0xFF800000> : vector<8xf32>
      %25 = vector.multi_reduction <maximumf>, %24, %cst_8 [0] : vector<8x8xf32> to vector<8xf32>
      %26 = vector.shape_cast %25 : vector<8xf32> to vector<1x8xf32>
      %27 = vector.shape_cast %26 : vector<1x8xf32> to vector<1x1x8xf32>
      %c0_9 = arith.constant 0 : index
      %c0_10 = arith.constant 0 : index
      %c0_11 = arith.constant 0 : index
      %28 = vector.load %arg4[%c0_9, %c0_10, %c0_11] : memref<1x1x8xf32, #tpu.memory_space<vmem>>, vector<1x1x8xf32>
      tpu.vector_store %arg4[%c0_9, %c0_10, %c0_11], %27 {strides = array<i32>} : memref<1x1x8xf32, #tpu.memory_space<vmem>>, vector<1x1x8xf32>,
      %cst_12 = arith.constant dense<0xFF800000> : vector<8xf32>
      %29 = vector.multi_reduction <maximumf>, %24, %cst_12 [1] : vector<8x8xf32> to vector<8xf32>
      %30 = vector.shape_cast %29 : vector<8xf32> to vector<8x1xf32>
      %31 = vector.shape_cast %30 : vector<8x1xf32> to vector<1x8x1xf32>
      %c0_13 = arith.constant 0 : index
      %c0_14 = arith.constant 0 : index
      %c0_15 = arith.constant 0 : index
      %32 = vector.load %arg5[%c0_13, %c0_14, %c0_15] : memref<1x8x1xf32, #tpu.memory_space<vmem>>, vector<1x8x1xf32>
      tpu.vector_store %arg5[%c0_13, %c0_14, %c0_15], %31 {strides = array<i32>} : memref<1x8x1xf32, #tpu.memory_space<vmem>>, vector<1x8x1xf32>,
    } else {
    }
    %true = arith.constant true
    %12 = arith.xori %9, %true : i1
    %13 = arith.extui %12 : i1 to i32
    %c0_i32_6 = arith.constant 0 : i32
    %14 = arith.cmpi ne, %13, %c0_i32_6 : i32
    scf.if %14 {
      %cst_7 = arith.constant dense<0xFF800000> : vector<8xf32>
      %15 = vector.multi_reduction <maximumf>, %4, %cst_7 [0] : vector<8x8xf32> to vector<8xf32>
      %16 = vector.shape_cast %15 : vector<8xf32> to vector<1x8xf32>
      %17 = vector.shape_cast %16 : vector<1x8xf32> to vector<1x1x8xf32>
      %c0_8 = arith.constant 0 : index
      %c0_9 = arith.constant 0 : index
      %c0_10 = arith.constant 0 : index
      %18 = vector.load %arg4[%c0_8, %c0_9, %c0_10] : memref<1x1x8xf32, #tpu.memory_space<vmem>>, vector<1x1x8xf32>
      tpu.vector_store %arg4[%c0_8, %c0_9, %c0_10], %17 {strides = array<i32>} : memref<1x1x8xf32, #tpu.memory_space<vmem>>, vector<1x1x8xf32>,
      %cst_11 = arith.constant dense<0xFF800000> : vector<8xf32>
      %19 = vector.multi_reduction <maximumf>, %4, %cst_11 [1] : vector<8x8xf32> to vector<8xf32>
      %20 = vector.shape_cast %19 : vector<8xf32> to vector<8x1xf32>
      %21 = vector.shape_cast %20 : vector<8x1xf32> to vector<1x8x1xf32>
      %c0_12 = arith.constant 0 : index
      %c0_13 = arith.constant 0 : index
      %c0_14 = arith.constant 0 : index
      %22 = vector.load %arg5[%c0_12, %c0_13, %c0_14] : memref<1x8x1xf32, #tpu.memory_space<vmem>>, vector<1x8x1xf32>
      tpu.vector_store %arg5[%c0_12, %c0_13, %c0_14], %21 {strides = array<i32>} : memref<1x8x1xf32, #tpu.memory_space<vmem>>, vector<1x8x1xf32>,
    } else {
    }
    return
  }
  func.func @transform_0(%arg0: i32, %arg1: i32) -> (i32, i32) {
    %c0_i32 = arith.constant 0 : i32
    %c0_i32_0 = arith.constant 0 : i32
    return %arg0, %c0_i32 : i32, i32
  }
  func.func @transform_1(%arg0: i32, %arg1: i32) -> (i32, i32) {
    %c0_i32 = arith.constant 0 : i32
    %c0_i32_0 = arith.constant 0 : i32
    return %c0_i32, %arg1 : i32, i32
  }
  func.func @transform_2(%arg0: i32, %arg1: i32) -> (i32, i32, i32) {
    %c0_i32 = arith.constant 0 : i32
    %c0_i32_0 = arith.constant 0 : i32
    return %arg0, %c0_i32, %arg1 : i32, i32, i32
  }
  func.func @transform_3(%arg0: i32, %arg1: i32) -> (i32, i32, i32) {
    %c0_i32 = arith.constant 0 : i32
    %c0_i32_0 = arith.constant 0 : i32
    return %arg1, %arg0, %c0_i32 : i32, i32, i32
  }
}

</mosaic_0001>

<llo_original>
// kernel: tpu_custom_call.1
$region0: #{tpu_custom_call.1}
  #allocation0 [shape = 'u32[]', space=smem, size = 0x4, offset = 0x4, fixed_abs, tag = 'smem constant byte address 0x4 - core index']
  #allocation1 [shape = 'u32[144,128]{1,0:T(1,128)}', space=vmem, size = 0x12000, scoped, tag = 'internal scratch']
  %s0 = inlined_call_operand.vmem [shape: f32[8,32], index: 0, kind: input, shape index: {}]
  %s1 = inlined_call_operand.vmem [shape: f32[32,8], index: 1, kind: input, shape index: {}]
  %s2 = inlined_call_operand.hbm [shape: f32[1,1,8], index: 2, kind: output, shape index: {0}]
  %s3 = inlined_call_operand.vmem [shape: f32[1,8,1], index: 3, kind: output, shape index: {1}]
  %4 = xla_tuple %s2, %s3
  %s5 = sld [smem:[#allocation0]]
  $region34: #{tpu_custom_call.1} parent=0
    _
  %s7 = ssub.s32 1, %s5
  %s8 = scalar_select 0, %s7, %s5
  $region1: #{tpu_custom_call.1} parent=0
    #allocation2 [shape = 'u8[512]{0}', space=vmem, size = 0x400, scoped, tag = 'output window, operand 0, single buffered']
    #allocation3 [shape = 's32[1]{0}', space=sflag, size = 0x4, scoped, tag = 'scoped memory for tpu_custom_call.1']
    %9 = vsyncpa [#allocation3], 0
    // Predicated region
    $region2: #{tpu_custom_call.1} parent=1 // pred_check
      _
    $region3: #{tpu_custom_call.1} parent=1 // pred_check_branch
      %11 = sbr.rel (0) target = $region5
    $region4: #{tpu_custom_call.1} parent=1 // pred_region
      _
    $region5: #{tpu_custom_call.1} parent=1 // pred_fallthru
      _
    // Predicated region
    $region6: #{tpu_custom_call.1} parent=1 // pred_check
      _
    $region7: #{tpu_custom_call.1} parent=1 // pred_check_branch
      %13 = sbr.rel (0) target = $region9
    $region8: #{tpu_custom_call.1} parent=1 // pred_region
      _
    $region9: #{tpu_custom_call.1} parent=1 // pred_fallthru
      _
    %s14 = smul.u32 0, 8
    %s15 = smul.u32 0, 8
    %v16 = vld [vmem:[%s0] sm:$0xff]
    %v17 = vld [vmem:[%s1] sm:$0xff]
    %v18 = vld [vmem:[%s1 + $0x8] sm:$0xff]
    %v19 = vld [vmem:[%s1 + $0x10] sm:$0xff]
    %v20 = vld [vmem:[%s1 + $0x18] sm:$0xff]
    %vm21 = vcmask 261120
    %v23 = vsel %vm21, %v16, 0
    %25 = vmatprep.subr.mxu0 0.0
    %26 = vmatpush1.msra.mxu0 %v17
    %27 = vmatprep.subr.mxu0 0.0
    %28 = vmatpush1.msra.mxu0 %v18
    %29 = vmatprep.subr.mxu0 0.0
    %30 = vmatpush1.msra.mxu0 %v19
    %31 = vmatprep.subr.mxu0 0.0
    %32 = vmatpush1.msra.mxu0 %v20
    %33 = vmatprep.subr.mxu0 0.0
    %34 = vmatpush1.msra.mxu0 0.0
    %35 = vmatprep.subr.mxu0 0.0
    %36 = vmatpush1.msra.mxu0 0.0
    %37 = vmatprep.subr.mxu0 0.0
    %38 = vmatpush1.msra.mxu0 0.0
    %39 = vmatprep.subr.mxu0 0.0
    %40 = vmatpush1.msra.mxu0 0.0
    %41 = vmatprep.subr.mxu0 0.0
    %42 = vmatpush1.msra.mxu0 0.0
    %43 = vmatprep.subr.mxu0 0.0
    %44 = vmatpush1.msra.mxu0 0.0
    %45 = vmatprep.subr.mxu0 0.0
    %46 = vmatpush1.msra.mxu0 0.0
    %47 = vmatprep.subr.mxu0 0.0
    %48 = vmatpush1.msra.mxu0 0.0
    %49 = vmatprep.subr.mxu0 0.0
    %50 = vmatpush1.msra.mxu0 0.0
    %51 = vmatprep.subr.mxu0 0.0
    %52 = vmatpush1.msra.mxu0 0.0
    %53 = vmatprep.subr.mxu0 0.0
    %54 = vmatpush1.msra.mxu0 0.0
    %55 = vmatprep.subr.mxu0 0.0
    %56 = vmatpush1.msra.mxu0 0.0
    %57 = vmatprep.subr.mxu0 0.0
    %58 = vmatpush1.msra.mxu0 0.0
    %59 = vmatprep.subr.mxu0 0.0
    %60 = vmatpush1.msra.mxu0 0.0
    %61 = vmatprep.subr.mxu0 0.0
    %62 = vmatpush1.msra.mxu0 0.0
    %63 = vmatprep.subr.mxu0 0.0
    %64 = vmatpush1.msra.mxu0 0.0
    %65 = vmatprep.subr.mxu0 0.0
    %66 = vmatpush1.msra.mxu0 0.0
    %67 = vmatprep.subr.mxu0 0.0
    %68 = vmatpush1.msra.mxu0 0.0
    %69 = vmatprep.subr.mxu0 0.0
    %70 = vmatpush1.msra.mxu0 0.0
    %71 = vmatprep.subr.mxu0 0.0
    %72 = vmatpush1.msra.mxu0 0.0
    %73 = vmatprep.subr.mxu0 0.0
    %74 = vmatpush1.msra.mxu0 0.0
    %75 = vmatprep.subr.mxu0 0.0
    %76 = vmatpush1.msra.mxu0 0.0
    %77 = vmatprep.subr.mxu0 0.0
    %78 = vmatpush1.msra.mxu0 0.0
    %79 = vmatprep.subr.mxu0 0.0
    %80 = vmatpush1.msra.mxu0 0.0
    %81 = vmatprep.subr.mxu0 0.0
    %82 = vmatpush1.msra.mxu0 0.0
    %83 = vmatprep.subr.mxu0 0.0
    %84 = vmatpush1.msra.mxu0 0.0
    %85 = vmatprep.subr.mxu0 0.0
    %86 = vmatpush1.msra.mxu0 0.0
    %87 = vmatprep.subr.mxu0 0.0
    %88 = vmatpush1.msra.mxu0 0.0
    %89 = vmatprep.mubr.f32.mxu0 0.0
    %90 = vmatmul.mubr.f32.gmra.mrb[0].mxu0 %v23
    %v91 = vpop.f32.mrb[0].mxu0
    %v92 = vadd.f32 0.0, %v91
    %v93 = vpop.f32.mrb[0].mxu0
    %94 = vdwg.mxu0
    %s95 = sadd.s32 %s15, 8
    %p96 = scmp.lt.s32.totalorder %s14, %s95
    %s97 = sadd.s32 %s14, 8
    %p98 = scmp.lt.s32.totalorder %s15, %s97
    %p99 = pnand %p96, %p98
    %p100 = pneg %p99
    // Predicated region
    $region10: #{tpu_custom_call.1} parent=1 // pred_check
      _
    $region11: #{tpu_custom_call.1} parent=1 // pred_check_branch
      %102 = sbr.rel (%p99) target = $region13
    $region12: #{tpu_custom_call.1} parent=1 // pred_region
      %v103 = vlaneseq
      %v104 = vshrl.u32 %v103, 7
      %v105 = vstv %s14
      %v106 = vadd.s32 %v105, %v104
      %v107 = vlaneseq
      %v108 = vand.u32 %v107, 127
      %v109 = vstv %s15
      %v110 = vadd.s32 %v109, %v108
      %vm111 = vcmp.eq.s32.totalorder %v106, %v110
      %v112 = vsub.f32 0.0, %v92
      %v113 = vsel %vm111, %v112, %v92
      %vm114 = vcmask 64512
      %v115 = vsel %vm114, %v113, -inf
      %v116 = vrot.slane %v115, 4
      %v117 = vmax.f32 %v115, %v116
      %v118 = vrot.slane %v117, 2
      %v119 = vmax.f32 %v117, %v118
      %v120 = vrot.slane %v119, 1
      %v121 = vmax.f32 %v119, %v120
      %vm122 = vcmask 57344
      %123 = vst.msk [vmem:[#allocation2] sm:$0x1] %vm122, %v121
      %124 = vmax.xlane.f32.xlu0 %v115
      %v125 = vpop.xlane.xlu0 %124
      %vm126 = vcmask 7168
      %127 = vst.msk [vmem:[%s3] sm:$0xff] %vm126, %v125
    $region13: #{tpu_custom_call.1} parent=1 // pred_fallthru
      _
    %p128 = pneg %p100
    // Predicated region
    $region14: #{tpu_custom_call.1} parent=1 // pred_check
      _
    $region15: #{tpu_custom_call.1} parent=1 // pred_check_branch
      %130 = sbr.rel (%p100) target = $region17
    $region16: #{tpu_custom_call.1} parent=1 // pred_region
      %vm131 = vcmask 64512
      %v132 = vsel %vm131, %v92, -inf
      %v133 = vrot.slane %v132, 4
      %v134 = vmax.f32 %v132, %v133
      %v135 = vrot.slane %v134, 2
      %v136 = vmax.f32 %v134, %v135
      %v137 = vrot.slane %v136, 1
      %v138 = vmax.f32 %v136, %v137
      %vm139 = vcmask 57344
      %140 = vst.msk [vmem:[#allocation2] sm:$0x1] %vm139, %v138
      %141 = vmax.xlane.f32.xlu0 %v132
      %v142 = vpop.xlane.xlu0 %141
      %vm143 = vcmask 7168
      %144 = vst.msk [vmem:[%s3] sm:$0xff] %vm143, %v142
    $region17: #{tpu_custom_call.1} parent=1 // pred_fallthru
      _
    // Predicated region
    $region18: #{tpu_custom_call.1} parent=1 // pred_check
      _
    $region19: #{tpu_custom_call.1} parent=1 // pred_check_branch
      %146 = sbr.rel (0) target = $region21
    $region20: #{tpu_custom_call.1} parent=1 // pred_region
      %s148 = ssub.s32 16, 16
      %149 = vsyncadd [#allocation3], %s148
      %s151 = sshll.u32 [#allocation2], 4
      %s152 = int_to_ptr.vmem [resolvable:$true] %s151
      %154 = dma.vmem_to_hbm [thread:$0]  %s152, 16, %s2, [#allocation3]
    $region21: #{tpu_custom_call.1} parent=1 // pred_fallthru
      _
    // Predicated region
    $region22: #{tpu_custom_call.1} parent=1 // pred_check
      _
    $region23: #{tpu_custom_call.1} parent=1 // pred_check_branch
      %156 = sbr.rel (0) target = $region25
    $region24: #{tpu_custom_call.1} parent=1 // pred_region
      _
    $region25: #{tpu_custom_call.1} parent=1 // pred_fallthru
      _
    // Predicated region
    $region26: #{tpu_custom_call.1} parent=1 // pred_check
      _
    $region27: #{tpu_custom_call.1} parent=1 // pred_check_branch
      %158 = sbr.rel (0) target = $region29
    $region28: #{tpu_custom_call.1} parent=1 // pred_region
      %159 = dma.done [#allocation3], 16
    $region29: #{tpu_custom_call.1} parent=1 // pred_fallthru
      _
    // Predicated region
    $region30: #{tpu_custom_call.1} parent=1 // pred_check
      _
    $region31: #{tpu_custom_call.1} parent=1 // pred_check_branch
      %161 = sbr.rel (0) target = $region33
    $region32: #{tpu_custom_call.1} parent=1 // pred_region
      _
    $region33: #{tpu_custom_call.1} parent=1 // pred_fallthru
      _
    %162 = vsyncpa [#allocation3], 1

</llo_original>
